<compile_context>
chip_gen: v7x
topology: tpu7x:2x2x1
jax: 0.10.0
libtpu: 0.0.40
codegen_flags: <defaults>
</compile_context>

<pallas_src>
import functools

import jax
import jax.numpy as jnp
from jax import lax
from jax.experimental import pallas as pl
from jax.experimental.pallas import tpu as pltpu


def _decoder_kernel(x_ref, w1_ref, b1_ref, w2_ref, b2_ref, o_ref, *, mxu_dtype):
    """One grid step: (bn, h_dim, T) pixels -> (bn, out_size, T)."""
    bn = x_ref.shape[0]
    # Tiny weights / biases: load once per step; cast weights for the MXU.
    w1 = w1_ref[...].astype(mxu_dtype)
    w2 = w2_ref[...].astype(mxu_dtype)
    b1 = b1_ref[...]                      # (h_dim, 1)  broadcasts along lanes
    b2 = b2_ref[...]                      # (out_size, 1)

    def body(i, carry):
        x = x_ref[i].astype(mxu_dtype)                            # (h_dim, T)
        # Stage 1: 1x1 conv == channel matmul, f32 accumulation, bias, ReLU.
        h = jnp.dot(w1, x, preferred_element_type=jnp.float32)
        h = jnp.maximum(h + b1, 0.0)
        # Stage 2: second 1x1 conv, f32 accumulation, bias, ReLU.
        o = jnp.dot(w2, h.astype(mxu_dtype),
                    preferred_element_type=jnp.float32)           # (out_size, T)
        o = jnp.maximum(o + b2, 0.0)
        o_ref[i] = o.astype(o_ref.dtype)
        return carry

    # bn is a small static int (<= 8): fully unroll for LLO scheduling.
    lax.fori_loop(0, bn, body, 0, unroll=True)


def _round_up(x, m):
    return ((x + m - 1) // m) * m


def _largest_divisor_leq(n, k):
    k = max(1, min(n, k))
    for d in range(k, 0, -1):
        if n % d == 0:
            return d
    return 1


def _plan_blocks(N, HW, max_tile_hw):
    """Pick (bn, tile, n_hw).

    tile is a multiple of 128 and never the raw full extent of a huge image:
    the grid is cdiv(HW, tile), so the last (partial) pixel block is masked by
    Pallas and VMEM use is bounded regardless of H*W.
    """
    cap = max(128, max_tile_hw - max_tile_hw % 128)
    tile = cap if HW >= cap else _round_up(HW, 128)
    n_hw = pl.cdiv(HW, tile)
    # Fold batch into the step for small spatial maps (amortize per-step cost).
    bn = _largest_divisor_leq(N, min(8, max(1, cap // tile)))
    # Keep >= 2 grid steps when possible so dual-TC chips (v7x) use both cores.
    if (N // bn) * n_hw < 2:
        if N >= 2:
            bn = _largest_divisor_leq(N, N // 2)
        elif HW > 128:
            tile = _round_up(pl.cdiv(HW, 2), 128)
            n_hw = pl.cdiv(HW, tile)
    return bn, tile, n_hw


def attention_value_decoder(x_nchw, w1, b1, w2, b2, *,
                            max_tile_hw=32768, mxu_dtype=jnp.bfloat16):
    """Pallas TPU forward of AttentionValueDecoder.

    x_nchw: (N, h_dim, H, W)
    w1:     (h_dim, h_dim)    -- PyTorch conv1.weight squeezed (out_ch, in_ch)
    b1:     (h_dim,)
    w2:     (out_size, h_dim) -- PyTorch conv2.weight squeezed (out_ch, in_ch)
    b2:     (out_size,)
    returns (N, out_size, H, W)

    mxu_dtype=jnp.bfloat16 is the fast MXU path (f32 accumulation, f32 bias /
    ReLU); pass jnp.float32 for exact f32 numerics matching PyTorch.
    """
    N, C, H, W = x_nchw.shape
    h_dim = w1.shape[1]
    out_size = w2.shape[0]
    assert C == h_dim and w1.shape[0] == h_dim and w2.shape[1] == h_dim
    HW = H * W

    # NCHW -> (N, C, H*W): free reshape, no transpose / HBM round-trip.
    x3d = x_nchw.reshape(N, C, HW)

    bn, tile, n_hw = _plan_blocks(N, HW, max_tile_hw)
    grid = (N // bn, n_hw)

    # Biases as (channels, 1) f32 blocks that broadcast along lanes.
    b1c = b1.reshape(h_dim, 1).astype(jnp.float32)
    b2c = b2.reshape(out_size, 1).astype(jnp.float32)

    # VMEM budget: double-buffered x/out blocks + in-kernel temporaries, with
    # 2x headroom; clamped comfortably under v7x's 64 MiB physical VMEM.
    xb = jnp.dtype(x_nchw.dtype).itemsize
    mb = jnp.dtype(mxu_dtype).itemsize
    blocks = 2 * bn * tile * (h_dim + out_size) * xb
    temps = tile * (h_dim * 4 + out_size * 4 + (2 * h_dim + out_size) * mb)
    weights = 2 * 4 * (h_dim * h_dim + out_size * h_dim + h_dim + out_size)
    vmem_limit = int(min(max(2 * (blocks + temps + weights), 32 << 20), 56 << 20))

    flops = 2 * N * HW * h_dim * (h_dim + out_size)
    bytes_accessed = int(N * HW * (h_dim + out_size) * xb
                         + 4 * (h_dim * h_dim + out_size * h_dim
                                + h_dim + out_size))

    kernel = functools.partial(_decoder_kernel, mxu_dtype=mxu_dtype)

    out3d = pl.pallas_call(
        kernel,
        out_shape=jax.ShapeDtypeStruct((N, out_size, HW), x_nchw.dtype),
        grid_spec=pltpu.PrefetchScalarGridSpec(
            num_scalar_prefetch=0,
            grid=grid,
            in_specs=[
                # x: (bn, h_dim, tile) block; pixels on lanes, channels on sublanes.
                pl.BlockSpec((bn, h_dim, tile), lambda b, j: (b, 0, j)),
                pl.BlockSpec((h_dim, h_dim), lambda b, j: (0, 0)),     # W1 (whole)
                pl.BlockSpec((h_dim, 1), lambda b, j: (0, 0)),         # b1
                pl.BlockSpec((out_size, h_dim), lambda b, j: (0, 0)),  # W2 (whole)
                pl.BlockSpec((out_size, 1), lambda b, j: (0, 0)),      # b2
            ],
            out_specs=pl.BlockSpec((bn, out_size, tile), lambda b, j: (b, 0, j)),
        ),
        compiler_params=pltpu.CompilerParams(
            dimension_semantics=("parallel", "parallel"),
            vmem_limit_bytes=vmem_limit),
        cost_estimate=pl.CostEstimate(flops=flops, transcendentals=0,
                                      bytes_accessed=bytes_accessed),
    )(x3d, w1, b1c, w2, b2c)

    # (N, out_size, H*W) -> NCHW: free reshape.
    return out3d.reshape(N, out_size, H, W)


def _reference(x_nchw, w1, b1, w2, b2):
    # Pure-JAX f32 reference of the PyTorch forward (1x1 convs == channel
    # matmuls), weights in PyTorch (out_ch, in_ch) layout.
    h = jnp.maximum(
        jnp.einsum("nchw,oc->nohw", x_nchw, w1,
                   precision=lax.Precision.HIGHEST)
        + b1[None, :, None, None], 0.0)
    o = jnp.maximum(
        jnp.einsum("nchw,oc->nohw", h, w2,
                   precision=lax.Precision.HIGHEST)
        + b2[None, :, None, None], 0.0)
    return o


if __name__ == "__main__":
    # Small shapes consistent with the module: batch=2, h_dim=32, spatial=16, out_size=8
    N, h_dim, Hs, Ws, out_size = 2, 32, 16, 16, 8

    key = jax.random.PRNGKey(0)
    kx, k1, kb1, k2, kb2 = jax.random.split(key, 5)

    x = jax.random.normal(kx, (N, h_dim, Hs, Ws), dtype=jnp.float32)
    # Parameters in PyTorch Conv2d layout: weight (out_ch, in_ch), bias (out_ch,).
    w1 = jax.random.normal(k1, (h_dim, h_dim), dtype=jnp.float32) * 0.1
    b1 = jax.random.normal(kb1, (h_dim,), dtype=jnp.float32) * 0.1
    w2 = jax.random.normal(k2, (out_size, h_dim), dtype=jnp.float32) * 0.1
    b2 = jax.random.normal(kb2, (out_size,), dtype=jnp.float32) * 0.1

    ref = _reference(x, w1, b1, w2, b2)

    # Exact f32 path (matches the PyTorch module's f32 numerics).
    out_f32 = jax.block_until_ready(
        attention_value_decoder(x, w1, b1, w2, b2, mxu_dtype=jnp.float32))
    assert out_f32.shape == (N, out_size, Hs, Ws)
    assert jnp.allclose(out_f32, ref, atol=1e-4, rtol=1e-4)

    # Default fast path: bf16 feeding the MXU, f32 accumulation / bias / ReLU.
    out_fast = jax.block_until_ready(attention_value_decoder(x, w1, b1, w2, b2))
    assert out_fast.shape == (N, out_size, Hs, Ws)
    assert jnp.allclose(out_fast, ref, atol=3e-2, rtol=3e-2)

    print("KERNEL_OK")
</pallas_src>

<mosaic_0001>
module attributes {stable_mosaic.version = 11 : i64} {
  func.func @_decoder_kernel(%arg0: i32, %arg1: i32, %arg2: memref<1x32x256xf32, #tpu.memory_space<vmem>>, %arg3: memref<32x32xf32, #tpu.memory_space<vmem>>, %arg4: memref<32x1xf32, #tpu.memory_space<vmem>>, %arg5: memref<8x32xf32, #tpu.memory_space<vmem>>, %arg6: memref<8x1xf32, #tpu.memory_space<vmem>>, %arg7: memref<1x8x256xf32, #tpu.memory_space<vmem>>) attributes {dimension_semantics = [#tpu.dimension_semantics<parallel>, #tpu.dimension_semantics<parallel>], iteration_bounds = array<i64: 2, 1>, scalar_prefetch = 0 : i64, scratch_operands = 0 : i64, tpu.core_type = #tpu.core_type<tc>, window_params = [{transform_indices = @transform_0, window_bounds = array<i64: 1, 32, 256>}, {pipeline_mode = #tpu.pipeline_mode<synchronous>, transform_indices = @transform_1, window_bounds = array<i64: 32, 32>}, {pipeline_mode = #tpu.pipeline_mode<synchronous>, transform_indices = @transform_2, window_bounds = array<i64: 32, 1>}, {pipeline_mode = #tpu.pipeline_mode<synchronous>, transform_indices = @transform_3, window_bounds = array<i64: 8, 32>}, {pipeline_mode = #tpu.pipeline_mode<synchronous>, transform_indices = @transform_4, window_bounds = array<i64: 8, 1>}, {transform_indices = @transform_5, window_bounds = array<i64: 1, 8, 256>}]} {
    %c0 = arith.constant 0 : index
    %c0_0 = arith.constant 0 : index
    %0 = vector.load %arg3[%c0, %c0_0] : memref<32x32xf32, #tpu.memory_space<vmem>>, vector<32x32xf32>
    %c0_1 = arith.constant 0 : index
    %c0_2 = arith.constant 0 : index
    %1 = vector.load %arg5[%c0_1, %c0_2] : memref<8x32xf32, #tpu.memory_space<vmem>>, vector<8x32xf32>
    %c0_3 = arith.constant 0 : index
    %c0_4 = arith.constant 0 : index
    %2 = vector.load %arg4[%c0_3, %c0_4] : memref<32x1xf32, #tpu.memory_space<vmem>>, vector<32x1xf32>
    %c0_5 = arith.constant 0 : index
    %c0_6 = arith.constant 0 : index
    %3 = vector.load %arg6[%c0_5, %c0_6] : memref<8x1xf32, #tpu.memory_space<vmem>>, vector<8x1xf32>
    %c0_i32 = arith.constant 0 : i32
    %4 = arith.index_cast %c0_i32 : i32 to index
    %c0_7 = arith.constant 0 : index
    %c0_8 = arith.constant 0 : index
    %5 = vector.load %arg2[%4, %c0_7, %c0_8] : memref<1x32x256xf32, #tpu.memory_space<vmem>>, vector<1x32x256xf32>
    %6 = vector.shape_cast %5 : vector<1x32x256xf32> to vector<32x256xf32>
    %cst = arith.constant dense<0.000000e+00> : vector<32x256xf32>
    %7 = tpu.matmul %0, %6, %cst {dimension_numbers = #tpu.dot_dimension_numbers<[1], [0], [0], [1], [0, 0, 1, 1], [], []>} : vector<32x32xf32>, vector<32x256xf32>, vector<32x256xf32> -> vector<32x256xf32>
    %8 = vector.broadcast %2 : vector<32x1xf32> to vector<32x256xf32>
    %9 = arith.addf %7, %8 : vector<32x256xf32>
    %cst_9 = arith.constant 0.000000e+00 : f32
    %10 = vector.broadcast %cst_9 : f32 to vector<32x256xf32>
    %11 = arith.maximumf %9, %10 : vector<32x256xf32>
    %cst_10 = arith.constant dense<0.000000e+00> : vector<8x256xf32>
    %12 = tpu.matmul %1, %11, %cst_10 {dimension_numbers = #tpu.dot_dimension_numbers<[1], [0], [0], [1], [0, 0, 1, 1], [], []>} : vector<8x32xf32>, vector<32x256xf32>, vector<8x256xf32> -> vector<8x256xf32>
    %13 = vector.broadcast %3 : vector<8x1xf32> to vector<8x256xf32>
    %14 = arith.addf %12, %13 : vector<8x256xf32>
    %cst_11 = arith.constant 0.000000e+00 : f32
    %15 = vector.broadcast %cst_11 : f32 to vector<8x256xf32>
    %16 = arith.maximumf %14, %15 : vector<8x256xf32>
    %17 = arith.index_cast %c0_i32 : i32 to index
    %c0_12 = arith.constant 0 : index
    %c0_13 = arith.constant 0 : index
    %18 = vector.load %arg7[%17, %c0_12, %c0_13] : memref<1x8x256xf32, #tpu.memory_space<vmem>>, vector<1x8x256xf32>
    %19 = vector.shape_cast %18 : vector<1x8x256xf32> to vector<8x256xf32>
    %20 = vector.shape_cast %16 : vector<8x256xf32> to vector<1x8x256xf32>
    tpu.vector_store %arg7[%17, %c0_12, %c0_13], %20 {strides = array<i32>} : memref<1x8x256xf32, #tpu.memory_space<vmem>>, vector<1x8x256xf32>,
    %c1_i32 = arith.constant 1 : i32
    return
  }
  func.func @transform_0(%arg0: i32, %arg1: i32) -> (i32, i32, i32) {
    %c0_i32 = arith.constant 0 : i32
    %c0_i32_0 = arith.constant 0 : i32
    return %arg0, %c0_i32, %arg1 : i32, i32, i32
  }
  func.func @transform_1(%arg0: i32, %arg1: i32) -> (i32, i32) {
    %c0_i32 = arith.constant 0 : i32
    %c0_i32_0 = arith.constant 0 : i32
    %c0_i32_1 = arith.constant 0 : i32
    return %c0_i32, %c0_i32_0 : i32, i32
  }
  func.func @transform_2(%arg0: i32, %arg1: i32) -> (i32, i32) {
    %c0_i32 = arith.constant 0 : i32
    %c0_i32_0 = arith.constant 0 : i32
    %c0_i32_1 = arith.constant 0 : i32
    return %c0_i32, %c0_i32_0 : i32, i32
  }
  func.func @transform_3(%arg0: i32, %arg1: i32) -> (i32, i32) {
    %c0_i32 = arith.constant 0 : i32
    %c0_i32_0 = arith.constant 0 : i32
    %c0_i32_1 = arith.constant 0 : i32
    return %c0_i32, %c0_i32_0 : i32, i32
  }
  func.func @transform_4(%arg0: i32, %arg1: i32) -> (i32, i32) {
    %c0_i32 = arith.constant 0 : i32
    %c0_i32_0 = arith.constant 0 : i32
    %c0_i32_1 = arith.constant 0 : i32
    return %c0_i32, %c0_i32_0 : i32, i32
  }
  func.func @transform_5(%arg0: i32, %arg1: i32) -> (i32, i32, i32) {
    %c0_i32 = arith.constant 0 : i32
    %c0_i32_0 = arith.constant 0 : i32
    return %arg0, %c0_i32, %arg1 : i32, i32, i32
  }
}

</mosaic_0001>

<llo_original>
// kernel: tpu_custom_call.1
$region0: #{tpu_custom_call.1}
  #allocation0 [shape = 'u32[]', space=smem, size = 0x4, offset = 0x4, fixed_abs, tag = 'smem constant byte address 0x4 - core index']
  #allocation1 [shape = 'u32[144,128]{1,0:T(1,128)}', space=vmem, size = 0x12000, scoped, tag = 'internal scratch']
  %s0 = inlined_call_operand.hbm [shape: f32[2,32,256], index: 0, kind: input, shape index: {}]
  %s1 = inlined_call_operand.vmem [shape: f32[32,32], index: 1, kind: input, shape index: {}]
  %s2 = inlined_call_operand.vmem [shape: f32[32,1], index: 2, kind: input, shape index: {}]
  %s3 = inlined_call_operand.vmem [shape: f32[8,32], index: 3, kind: input, shape index: {}]
  %s4 = inlined_call_operand.vmem [shape: f32[8,1], index: 4, kind: input, shape index: {}]
  %s5 = inlined_call_operand.hbm [shape: f32[2,8,256], index: 5, kind: output, shape index: {}]
  %s6 = sld [smem:[#allocation0]]
  $region57: #{tpu_custom_call.1} parent=0
    _
  %s8 = ssub.s32 1, %s6
  %s9 = scalar_select 0, %s8, %s6
  $region1: #{tpu_custom_call.1} parent=0
    #allocation2 [shape = 'u8[65536]{0}', space=vmem, size = 0x10000, scoped, tag = 'input window, operand 0']
    #allocation3 [shape = 's32[2]{0}', space=sflag, size = 0x8, scoped, tag = 'scoped memory for tpu_custom_call.1']
    #allocation4 [shape = 's32[2]{0}', space=sflag, size = 0x8, scoped, tag = 'scoped memory for tpu_custom_call.1']
    #allocation5 [shape = 'u8[16384]{0}', space=vmem, size = 0x4000, scoped, tag = 'output window, operand 0']
    %10 = vsyncpa [#allocation3], 0
    %s11 = scalar_lea.sflag [#allocation3], 1
    %12 = vsyncpa %s11, 0
    %13 = vsyncpa [#allocation4], 0
    %s14 = scalar_lea.sflag [#allocation4], 1
    %15 = vsyncpa %s14, 0
    loop: start=0, step=1, limit=4
    $region2: #{tpu_custom_call.1} parent=1 // loop_pre_header
      _
    $region3: #{tpu_custom_call.1} parent=1 // loop_header
      %s17 = sphi 0, %s21
      %p18 = scmp.ge.s32.totalorder %s17, 4
      %s24 = sphi 0, %s36
      %s25 = sphi 0, %s32
      %s26 = sphi 0, %s24
      %s27 = sphi 0, %s25
      %s28 = sphi 0, %s26
      %s29 = sphi 0, %s27
      %s41 = sphi 0, %s43
      %s44 = sphi 0, %s41
      %s45 = sphi 0, %s44
      %s61 = sphi 0, %s45
      %s65 = sphi 0, %s65
      %s67 = sphi 0, %s65
      %s68 = sphi 0, %s67
      %s82 = sphi 0, %s68
      %s86 = sphi 0, %s86
      %s88 = sphi 0, %s86
      %s89 = sphi 0, %s88
      %s103 = sphi 0, %s89
      %s107 = sphi 0, %s107
      %s109 = sphi 0, %s107
      %s110 = sphi 0, %s109
      %s124 = sphi 0, %s110
      %s128 = sphi 0, %s128
      %s130 = sphi 0, %s128
      %s131 = sphi 0, %s130
      %s145 = sphi 0, %s131
      %s153 = sphi 0, %s155
      %s156 = sphi 0, %s153
      %s157 = sphi 0, %s156
      %s173 = sphi 0, %s157
    $region4: #{tpu_custom_call.1} parent=1 // loop_header_branch
      %20 = sbr.rel (%p18) target = $region8
    $region5: #{tpu_custom_call.1} parent=1 // loop_body
      %s22 = ssub.s32 %s17, 1
      %s23 = ssub.s32 %s17, 2
      %s30 = sadd.s32 1, %s25
      %p31 = scmp.ge.s32.totalorder %s30, 1
      %s32 = scalar_select %p31, 0, %s30
      %s33 = sadd.s32 1, %s24
      %s34 = scalar_select %p31, %s33, %s24
      %p35 = scmp.ge.s32.totalorder %s34, 2
      %s36 = scalar_select %p35, 0, %s34
      %s37 = ssub.s32 %s24, %s36
      %s38 = ssub.s32 %s25, %s32
      %s39 = sor.u32 %s37, %s38
      %p40 = scmp.eq.s32.totalorder %s39, 0
      %s42 = sadd.s32 %s41, 1
      %s43 = scalar_select %p40, %s41, %s42
      %p46 = pneg %p40
      %p47 = scmp.eq.s32.totalorder %s17, 1
      %p48 = por %p46, %p47
      %p49 = scmp.ne.s32.totalorder %s41, %s44
      %p50 = scmp.eq.s32.totalorder %s17, 0
      %p51 = por %p49, %p50
      %p52 = scmp.ne.s32.totalorder %s41, %s44
      %p53 = scmp.eq.s32.totalorder %s22, 1
      %p54 = por %p52, %p53
      %p55 = scmp.ne.s32.totalorder %s44, %s45
      %p56 = scmp.eq.s32.totalorder %s22, 0
      %p57 = por %p55, %p56
      %p58 = scmp.ne.s32.totalorder %s44, %s45
      %p59 = scmp.eq.s32.totalorder %s23, 1
      %p60 = por %p58, %p59
      %p62 = scmp.ne.s32.totalorder %s45, %s61
      %p63 = scmp.eq.s32.totalorder %s23, 0
      %p64 = por %p62, %p63
      %s66 = sadd.s32 %s65, 1
      %p69 = scmp.eq.s32.totalorder %s17, 1
      %p70 = scmp.ne.s32.totalorder %s65, %s67
      %p71 = scmp.eq.s32.totalorder %s17, 0
      %p72 = por %p70, %p71
      %p73 = scmp.ne.s32.totalorder %s65, %s67
      %p74 = scmp.eq.s32.totalorder %s22, 1
      %p75 = por %p73, %p74
      %p76 = scmp.ne.s32.totalorder %s67, %s68
      %p77 = scmp.eq.s32.totalorder %s22, 0
      %p78 = por %p76, %p77
      %p79 = scmp.ne.s32.totalorder %s67, %s68
      %p80 = scmp.eq.s32.totalorder %s23, 1
      %p81 = por %p79, %p80
      %p83 = scmp.ne.s32.totalorder %s68, %s82
      %p84 = scmp.eq.s32.totalorder %s23, 0
      %p85 = por %p83, %p84
      %s87 = sadd.s32 %s86, 1
      %p90 = scmp.eq.s32.totalorder %s17, 1
      %p91 = scmp.ne.s32.totalorder %s86, %s88
      %p92 = scmp.eq.s32.totalorder %s17, 0
      %p93 = por %p91, %p92
      %p94 = scmp.ne.s32.totalorder %s86, %s88
      %p95 = scmp.eq.s32.totalorder %s22, 1
      %p96 = por %p94, %p95
      %p97 = scmp.ne.s32.totalorder %s88, %s89
      %p98 = scmp.eq.s32.totalorder %s22, 0
      %p99 = por %p97, %p98
      %p100 = scmp.ne.s32.totalorder %s88, %s89
      %p101 = scmp.eq.s32.totalorder %s23, 1
      %p102 = por %p100, %p101
      %p104 = scmp.ne.s32.totalorder %s89, %s103
      %p105 = scmp.eq.s32.totalorder %s23, 0
      %p106 = por %p104, %p105
      %s108 = sadd.s32 %s107, 1
      %p111 = scmp.eq.s32.totalorder %s17, 1
      %p112 = scmp.ne.s32.totalorder %s107, %s109
      %p113 = scmp.eq.s32.totalorder %s17, 0
      %p114 = por %p112, %p113
      %p115 = scmp.ne.s32.totalorder %s107, %s109
      %p116 = scmp.eq.s32.totalorder %s22, 1
      %p117 = por %p115, %p116
      %p118 = scmp.ne.s32.totalorder %s109, %s110
      %p119 = scmp.eq.s32.totalorder %s22, 0
      %p120 = por %p118, %p119
      %p121 = scmp.ne.s32.totalorder %s109, %s110
      %p122 = scmp.eq.s32.totalorder %s23, 1
      %p123 = por %p121, %p122
      %p125 = scmp.ne.s32.totalorder %s110, %s124
      %p126 = scmp.eq.s32.totalorder %s23, 0
      %p127 = por %p125, %p126
      %s129 = sadd.s32 %s128, 1
      %p132 = scmp.eq.s32.totalorder %s17, 1
      %p133 = scmp.ne.s32.totalorder %s128, %s130
      %p134 = scmp.eq.s32.totalorder %s17, 0
      %p135 = por %p133, %p134
      %p136 = scmp.ne.s32.totalorder %s128, %s130
      %p137 = scmp.eq.s32.totalorder %s22, 1
      %p138 = por %p136, %p137
      %p139 = scmp.ne.s32.totalorder %s130, %s131
      %p140 = scmp.eq.s32.totalorder %s22, 0
      %p141 = por %p139, %p140
      %p142 = scmp.ne.s32.totalorder %s130, %s131
      %p143 = scmp.eq.s32.totalorder %s23, 1
      %p144 = por %p142, %p143
      %p146 = scmp.ne.s32.totalorder %s131, %s145
      %p147 = scmp.eq.s32.totalorder %s23, 0
      %p148 = por %p146, %p147
      %s149 = ssub.s32 %s24, %s36
      %s150 = ssub.s32 %s25, %s32
      %s151 = sor.u32 %s149, %s150
      %p152 = scmp.eq.s32.totalorder %s151, 0
      %s154 = sadd.s32 %s153, 1
      %s155 = scalar_select %p152, %s153, %s154
      %p158 = pneg %p152
      %p159 = scmp.eq.s32.totalorder %s17, 1
      %p160 = por %p158, %p159
      %p161 = scmp.ne.s32.totalorder %s153, %s156
      %p162 = scmp.eq.s32.totalorder %s17, 0
      %p163 = por %p161, %p162
      %p164 = scmp.ne.s32.totalorder %s153, %s156
      %p165 = scmp.eq.s32.totalorder %s22, 1
      %p166 = por %p164, %p165
      %p167 = scmp.ne.s32.totalorder %s156, %s157
      %p168 = scmp.eq.s32.totalorder %s22, 0
      %p169 = por %p167, %p168
      %p170 = scmp.ne.s32.totalorder %s156, %s157
      %p171 = scmp.eq.s32.totalorder %s23, 1
      %p172 = por %p170, %p171
      %p174 = scmp.ne.s32.totalorder %s157, %s173
      %p175 = scmp.eq.s32.totalorder %s23, 0
      %p176 = por %p174, %p175
      %p177 = scmp.le.s32.totalorder 1, %s17
      %p178 = scmp.lt.s32.totalorder %s17, 3
      %p179 = pnand %p177, %p178
      %p180 = pneg %p179
      // Predicated region
      $region9: #{tpu_custom_call.1} parent=5 // pred_check
        _
      $region10: #{tpu_custom_call.1} parent=5 // pred_check_branch
        %182 = sbr.rel (%p179) target = $region12
      $region11: #{tpu_custom_call.1} parent=5 // pred_region
        %s183 = ssub.s32 %s17, 1
        // Predicated region
        $region13: #{tpu_custom_call.1} parent=11 // pred_check
          %p184 = pneg %p78
        $region14: #{tpu_custom_call.1} parent=11 // pred_check_branch
          %186 = sbr.rel (%p184) target = $region16
        $region15: #{tpu_custom_call.1} parent=11 // pred_region
          _
        $region16: #{tpu_custom_call.1} parent=11 // pred_fallthru
          _
        // Predicated region
        $region17: #{tpu_custom_call.1} parent=11 // pred_check
          %p187 = pneg %p99
        $region18: #{tpu_custom_call.1} parent=11 // pred_check_branch
          %189 = sbr.rel (%p187) target = $region20
        $region19: #{tpu_custom_call.1} parent=11 // pred_region
          _
        $region20: #{tpu_custom_call.1} parent=11 // pred_fallthru
          _
        // Predicated region
        $region21: #{tpu_custom_call.1} parent=11 // pred_check
          %p190 = pneg %p120
        $region22: #{tpu_custom_call.1} parent=11 // pred_check_branch
          %192 = sbr.rel (%p190) target = $region24
        $region23: #{tpu_custom_call.1} parent=11 // pred_region
          _
        $region24: #{tpu_custom_call.1} parent=11 // pred_fallthru
          _
        // Predicated region
        $region25: #{tpu_custom_call.1} parent=11 // pred_check
          %p193 = pneg %p141
        $region26: #{tpu_custom_call.1} parent=11 // pred_check_branch
          %195 = sbr.rel (%p193) target = $region28
        $region27: #{tpu_custom_call.1} parent=11 // pred_region
          _
        $region28: #{tpu_custom_call.1} parent=11 // pred_fallthru
          _
      $region12: #{tpu_custom_call.1} parent=5 // pred_fallthru
        _
      %p196 = scmp.lt.s32.totalorder %s17, 2
      // Predicated region
      $region29: #{tpu_custom_call.1} parent=5 // pred_check
        %p197 = pneg %p196
      $region30: #{tpu_custom_call.1} parent=5 // pred_check_branch
        %199 = sbr.rel (%p197) target = $region32
      $region31: #{tpu_custom_call.1} parent=5 // pred_region
        // Predicated region
        $region33: #{tpu_custom_call.1} parent=31 // pred_check
          %p200 = pneg %p51
        $region34: #{tpu_custom_call.1} parent=31 // pred_check_branch
          %202 = sbr.rel (%p200) target = $region36
        $region35: #{tpu_custom_call.1} parent=31 // pred_region
          %s203 = sand.u32 %s41, 1
          %s204 = scalar_lea.sflag [#allocation3], %s203
          %s205 = sand.u32 %s41, 1
          %s206 = smul.addr %s205, 64
          %s207 = scalar_lea.vmem [#allocation2], %s206
          %s208 = smul.u32 2, %s25
          %s210 = ssub.s32 1024, 1024
          %211 = vsyncadd %s204, %s210
          %s212 = smul.addr %s24, 8
          %s213 = sadd.s32 %s208, %s212
          %s214 = smul.addr %s213, 128
          %s215 = scalar_lea.hbm %s0, %s214
          %s216 = sshll.u32 %s207, 4
          %s217 = int_to_ptr.vmem [resolvable:$true] %s216
          %222 = dma.hbm_to_vmem [thread:$0]  %s215, 1024, %s217, %s204, 256, 256, 16
        $region36: #{tpu_custom_call.1} parent=31 // pred_fallthru
          _
      $region32: #{tpu_custom_call.1} parent=5 // pred_fallthru
        _
      %p223 = scmp.le.s32.totalorder 1, %s17
      %p224 = scmp.lt.s32.totalorder %s17, 3
      %p225 = pnand %p223, %p224
      %p226 = pneg %p225
      // Predicated region
      $region37: #{tpu_custom_call.1} parent=5 // pred_check
        _
      $region38: #{tpu_custom_call.1} parent=5 // pred_check_branch
        %228 = sbr.rel (%p225) target = $region40
      $region39: #{tpu_custom_call.1} parent=5 // pred_region
        %s229 = ssub.s32 %s17, 1
        %s230 = sand.u32 %s44, 1
        %s231 = scalar_lea.sflag [#allocation3], %s230
        %s232 = sand.u32 %s44, 1
        %s233 = smul.addr %s232, 64
        %s234 = scalar_lea.vmem [#allocation2], %s233
        // Predicated region
        $region41: #{tpu_custom_call.1} parent=39 // pred_check
          %p235 = pneg %p57
        $region42: #{tpu_custom_call.1} parent=39 // pred_check_branch
          %237 = sbr.rel (%p235) target = $region44
        $region43: #{tpu_custom_call.1} parent=39 // pred_region
          %238 = dma.done %s231, 1024
        $region44: #{tpu_custom_call.1} parent=39 // pred_fallthru
          _
        %s239 = sand.u32 %s44, 1
        %s240 = scalar_lea.sflag [#allocation3], %s239
        %s241 = sand.u32 %s44, 1
        %s242 = smul.addr %s241, 64
        %s243 = scalar_lea.vmem [#allocation2], %s242
        %p244 = pneg %p57
        %p245 = pneg %p54
        %p246 = pneg %p78
        %p247 = pneg %p75
        %p248 = pneg %p99
        %p249 = pneg %p96
        %p250 = pneg %p120
        %p251 = pneg %p117
        %p252 = pneg %p141
        %p253 = pneg %p138
        %p254 = pneg %p169
        %p255 = pneg %p166
        %s256 = sand.u32 %s156, 1
        %s257 = scalar_lea.sflag [#allocation4], %s256
        %s258 = sand.u32 %s156, 1
        %s259 = smul.addr %s258, 16
        %s260 = scalar_lea.vmem [#allocation5], %s259
        %s261 = smul.u32 2, %s27
        %s262 = smul.u32 2, %s27
        %v263 = vld [vmem:[%s1] sm:$0xff]
        %v264 = vld [vmem:[%s1 + $0x8] sm:$0xff]
        %v265 = vld [vmem:[%s1 + $0x10] sm:$0xff]
        %v266 = vld [vmem:[%s1 + $0x18] sm:$0xff]
        %v267 = vld [vmem:[%s3] sm:$0xff]
        %v268 = vld [vmem:[%s2] sm:$0xff]
        %v269 = vld [vmem:[%s2 + $0x8] sm:$0xff]
        %v270 = vld [vmem:[%s2 + $0x10] sm:$0xff]
        %v271 = vld [vmem:[%s2 + $0x18] sm:$0xff]
        %v272 = vld [vmem:[%s4] sm:$0xff]
        %v273 = vld [vmem:[%s234] sm:$0xff]
        %v274 = vld [vmem:[%s234 + $0x8] sm:$0xff]
        %v275 = vld [vmem:[%s234 + $0x10] sm:$0xff]
        %v276 = vld [vmem:[%s234 + $0x18] sm:$0xff]
        %v277 = vld [vmem:[%s234 + $0x20] sm:$0xff]
        %v278 = vld [vmem:[%s234 + $0x28] sm:$0xff]
        %v279 = vld [vmem:[%s234 + $0x30] sm:$0xff]
        %v280 = vld [vmem:[%s234 + $0x38] sm:$0xff]
        %282 = vset.pattern.permute.xlu0 0
        %283 = vperm.xlu0 %282, %v268
        %v284 = vpop.permute.xlu0 %283
        %287 = vset.pattern.permute.xlu0 0
        %288 = vperm.xlu0 %287, %v269
        %v289 = vpop.permute.xlu0 %288
        %292 = vset.pattern.permute.xlu0 0
        %293 = vperm.xlu0 %292, %v270
        %v294 = vpop.permute.xlu0 %293
        %297 = vset.pattern.permute.xlu0 0
        %298 = vperm.xlu0 %297, %v271
        %v299 = vpop.permute.xlu0 %298
        %vm301 = vcmask 261120
        %v303 = vsel %vm301, %v263, 0
        %v306 = vsel %vm301, %v264, 0
        %v309 = vsel %vm301, %v265, 0
        %v312 = vsel %vm301, %v266, 0
        %314 = vmatprep.subr.mxu0 %v274
        %315 = vmatpush1.msra.mxu0 %v273
        %316 = vmatprep.subr.mxu0 %v276
        %317 = vmatpush1.msra.mxu0 %v275
        %318 = vmatprep.subr.mxu0 %v278
        %319 = vmatpush1.msra.mxu0 %v277
        %320 = vmatprep.subr.mxu0 %v280
        %321 = vmatpush1.msra.mxu0 %v279
        %322 = vmatprep.subr.mxu0 0.0
        %323 = vmatpush1.msra.mxu0 0.0
        %324 = vmatprep.subr.mxu0 0.0
        %325 = vmatpush1.msra.mxu0 0.0
        %326 = vmatprep.subr.mxu0 0.0
        %327 = vmatpush1.msra.mxu0 0.0
        %328 = vmatprep.subr.mxu0 0.0
        %329 = vmatpush1.msra.mxu0 0.0
        %330 = vmatprep.subr.mxu0 0.0
        %331 = vmatpush1.msra.mxu0 0.0
        %332 = vmatprep.subr.mxu0 0.0
        %333 = vmatpush1.msra.mxu0 0.0
        %334 = vmatprep.subr.mxu0 0.0
        %335 = vmatpush1.msra.mxu0 0.0
        %336 = vmatprep.subr.mxu0 0.0
        %337 = vmatpush1.msra.mxu0 0.0
        %338 = vmatprep.subr.mxu0 0.0
        %339 = vmatpush1.msra.mxu0 0.0
        %340 = vmatprep.subr.mxu0 0.0
        %341 = vmatpush1.msra.mxu0 0.0
        %342 = vmatprep.subr.mxu0 0.0
        %343 = vmatpush1.msra.mxu0 0.0
        %344 = vmatprep.subr.mxu0 0.0
        %345 = vmatpush1.msra.mxu0 0.0
        %346 = vmatprep.subr.mxu0 0.0
        %347 = vmatpush1.msra.mxu0 0.0
        %348 = vmatprep.subr.mxu0 0.0
        %349 = vmatpush1.msra.mxu0 0.0
        %350 = vmatprep.subr.mxu0 0.0
        %351 = vmatpush1.msra.mxu0 0.0
        %352 = vmatprep.subr.mxu0 0.0
        %353 = vmatpush1.msra.mxu0 0.0
        %354 = vmatprep.subr.mxu0 0.0
        %355 = vmatpush1.msra.mxu0 0.0
        %356 = vmatprep.subr.mxu0 0.0
        %357 = vmatpush1.msra.mxu0 0.0
        %358 = vmatprep.subr.mxu0 0.0
        %359 = vmatpush1.msra.mxu0 0.0
        %360 = vmatprep.subr.mxu0 0.0
        %361 = vmatpush1.msra.mxu0 0.0
        %362 = vmatprep.subr.mxu0 0.0
        %363 = vmatpush1.msra.mxu0 0.0
        %364 = vmatprep.subr.mxu0 0.0
        %365 = vmatpush1.msra.mxu0 0.0
        %366 = vmatprep.subr.mxu0 0.0
        %367 = vmatpush1.msra.mxu0 0.0
        %368 = vmatprep.subr.mxu0 0.0
        %369 = vmatpush1.msra.mxu0 0.0
        %370 = vmatprep.subr.mxu0 0.0
        %371 = vmatpush1.msra.mxu0 0.0
        %372 = vmatprep.subr.mxu0 0.0
        %373 = vmatpush1.msra.mxu0 0.0
        %374 = vmatprep.subr.mxu0 0.0
        %375 = vmatpush1.msra.mxu0 0.0
        %376 = vmatprep.subr.mxu0 0.0
        %377 = vmatpush1.msra.mxu0 0.0
        %378 = vmatprep.mubr.f32.mxu0 0.0
        %379 = vmatmul.mubr.f32.gmra.mrb[0].mxu0 %v303
        %v380 = vpop.f32.mrb[0].mxu0
        %v381 = vadd.f32 %v284, %v380
        %v382 = vpop.f32.mrb[0].mxu0
        %v383 = vadd.f32 %v284, %v382
        %384 = vmatprep.mubr.f32.mxu0 0.0
        %385 = vmatmul.mubr.f32.gmra.mrb[0].mxu0 %v306
        %v386 = vpop.f32.mrb[0].mxu0
        %v387 = vadd.f32 %v289, %v386
        %v388 = vpop.f32.mrb[0].mxu0
        %v389 = vadd.f32 %v289, %v388
        %390 = vmatprep.mubr.f32.mxu0 0.0
        %391 = vmatmul.mubr.f32.gmra.mrb[0].mxu0 %v309
        %v392 = vpop.f32.mrb[0].mxu0
        %v393 = vadd.f32 %v294, %v392
        %v394 = vpop.f32.mrb[0].mxu0
        %v395 = vadd.f32 %v294, %v394
        %396 = vmatprep.mubr.f32.mxu0 0.0
        %397 = vmatmul.mubr.f32.gmra.mrb[0].mxu0 %v312
        %v398 = vpop.f32.mrb[0].mxu0
        %v399 = vadd.f32 %v299, %v398
        %v400 = vpop.f32.mrb[0].mxu0
        %v401 = vadd.f32 %v299, %v400
        %402 = vdwg.mxu0
        %v403 = vmax.f32 %v381, 0.0
        %v404 = vmax.f32 %v383, 0.0
        %v405 = vmax.f32 %v387, 0.0
        %v406 = vmax.f32 %v389, 0.0
        %v407 = vmax.f32 %v393, 0.0
        %v408 = vmax.f32 %v395, 0.0
        %v409 = vmax.f32 %v399, 0.0
        %v410 = vmax.f32 %v401, 0.0
        %412 = vset.pattern.permute.xlu0 0
        %413 = vperm.xlu0 %412, %v272
        %v414 = vpop.permute.xlu0 %413
        %v417 = vsel %vm301, %v267, 0
        %419 = vmatprep.subr.mxu0 %v404
        %420 = vmatpush1.msra.mxu0 %v403
        %421 = vmatprep.subr.mxu0 %v406
        %422 = vmatpush1.msra.mxu0 %v405
        %423 = vmatprep.subr.mxu0 %v408
        %424 = vmatpush1.msra.mxu0 %v407
        %425 = vmatprep.subr.mxu0 %v410
        %426 = vmatpush1.msra.mxu0 %v409
        %427 = vmatprep.subr.mxu0 0.0
        %428 = vmatpush1.msra.mxu0 0.0
        %429 = vmatprep.subr.mxu0 0.0
        %430 = vmatpush1.msra.mxu0 0.0
        %431 = vmatprep.subr.mxu0 0.0
        %432 = vmatpush1.msra.mxu0 0.0
        %433 = vmatprep.subr.mxu0 0.0
        %434 = vmatpush1.msra.mxu0 0.0
        %435 = vmatprep.subr.mxu0 0.0
        %436 = vmatpush1.msra.mxu0 0.0
        %437 = vmatprep.subr.mxu0 0.0
        %438 = vmatpush1.msra.mxu0 0.0
        %439 = vmatprep.subr.mxu0 0.0
        %440 = vmatpush1.msra.mxu0 0.0
        %441 = vmatprep.subr.mxu0 0.0
        %442 = vmatpush1.msra.mxu0 0.0
        %443 = vmatprep.subr.mxu0 0.0
        %444 = vmatpush1.msra.mxu0 0.0
        %445 = vmatprep.subr.mxu0 0.0
        %446 = vmatpush1.msra.mxu0 0.0
        %447 = vmatprep.subr.mxu0 0.0
        %448 = vmatpush1.msra.mxu0 0.0
        %449 = vmatprep.subr.mxu0 0.0
        %450 = vmatpush1.msra.mxu0 0.0
        %451 = vmatprep.subr.mxu0 0.0
        %452 = vmatpush1.msra.mxu0 0.0
        %453 = vmatprep.subr.mxu0 0.0
        %454 = vmatpush1.msra.mxu0 0.0
        %455 = vmatprep.subr.mxu0 0.0
        %456 = vmatpush1.msra.mxu0 0.0
        %457 = vmatprep.subr.mxu0 0.0
        %458 = vmatpush1.msra.mxu0 0.0
        %459 = vmatprep.subr.mxu0 0.0
        %460 = vmatpush1.msra.mxu0 0.0
        %461 = vmatprep.subr.mxu0 0.0
        %462 = vmatpush1.msra.mxu0 0.0
        %463 = vmatprep.subr.mxu0 0.0
        %464 = vmatpush1.msra.mxu0 0.0
        %465 = vmatprep.subr.mxu0 0.0
        %466 = vmatpush1.msra.mxu0 0.0
        %467 = vmatprep.subr.mxu0 0.0
        %468 = vmatpush1.msra.mxu0 0.0
        %469 = vmatprep.subr.mxu0 0.0
        %470 = vmatpush1.msra.mxu0 0.0
        %471 = vmatprep.subr.mxu0 0.0
        %472 = vmatpush1.msra.mxu0 0.0
        %473 = vmatprep.subr.mxu0 0.0
        %474 = vmatpush1.msra.mxu0 0.0
        %475 = vmatprep.subr.mxu0 0.0
        %476 = vmatpush1.msra.mxu0 0.0
        %477 = vmatprep.subr.mxu0 0.0
        %478 = vmatpush1.msra.mxu0 0.0
        %479 = vmatprep.subr.mxu0 0.0
        %480 = vmatpush1.msra.mxu0 0.0
        %481 = vmatprep.subr.mxu0 0.0
        %482 = vmatpush1.msra.mxu0 0.0
        %483 = vmatprep.mubr.f32.mxu0 0.0
        %484 = vmatmul.mubr.f32.gmra.mrb[0].mxu0 %v417
        %v485 = vpop.f32.mrb[0].mxu0
        %v486 = vadd.f32 %v414, %v485
        %v487 = vpop.f32.mrb[0].mxu0
        %v488 = vadd.f32 %v414, %v487
        %489 = vdwg.mxu0
        %v490 = vmax.f32 %v486, 0.0
        %v491 = vmax.f32 %v488, 0.0
        %492 = vst [vmem:[%s260] sm:$0xff] %v490
        %493 = vst [vmem:[%s260 + $0x8] sm:$0xff] %v491
        %s494 = sand.u32 %s156, 1
        %s495 = scalar_lea.sflag [#allocation4], %s494
        %s496 = sand.u32 %s156, 1
        %s497 = smul.addr %s496, 16
        %s498 = scalar_lea.vmem [#allocation5], %s497
        // Predicated region
        $region45: #{tpu_custom_call.1} parent=39 // pred_check
          %p499 = pneg %p166
        $region46: #{tpu_custom_call.1} parent=39 // pred_check_branch
          %501 = sbr.rel (%p499) target = $region48
        $region47: #{tpu_custom_call.1} parent=39 // pred_region
          %s502 = smul.u32 2, %s27
          %s504 = ssub.s32 256, 256
          %505 = vsyncadd %s495, %s504
          %s506 = smul.addr %s26, 2
          %s507 = sadd.s32 %s502, %s506
          %s508 = smul.addr %s507, 128
          %s509 = scalar_lea.hbm %s5, %s508
          %s511 = sshll.u32 %s498, 4
          %s512 = int_to_ptr.vmem [resolvable:$true] %s511
          %514 = dma.vmem_to_hbm [thread:$0]  %s512, 256, %s509, %s495
        $region48: #{tpu_custom_call.1} parent=39 // pred_fallthru
          _
      $region40: #{tpu_custom_call.1} parent=5 // pred_fallthru
        _
      %p515 = scmp.le.s32.totalorder 2, %s17
      // Predicated region
      $region49: #{tpu_custom_call.1} parent=5 // pred_check
        %p516 = pneg %p515
      $region50: #{tpu_custom_call.1} parent=5 // pred_check_branch
        %518 = sbr.rel (%p516) target = $region52
      $region51: #{tpu_custom_call.1} parent=5 // pred_region
        %s519 = ssub.s32 %s17, 2
        // Predicated region
        $region53: #{tpu_custom_call.1} parent=51 // pred_check
          %p520 = pneg %p172
        $region54: #{tpu_custom_call.1} parent=51 // pred_check_branch
          %522 = sbr.rel (%p520) target = $region56
        $region55: #{tpu_custom_call.1} parent=51 // pred_region
          %s523 = sand.u32 %s157, 1
          %s524 = scalar_lea.sflag [#allocation4], %s523
          %s525 = sand.u32 %s157, 1
          %s526 = smul.addr %s525, 16
          %s527 = scalar_lea.vmem [#allocation5], %s526
          %528 = dma.done %s524, 256
        $region56: #{tpu_custom_call.1} parent=51 // pred_fallthru
          _
      $region52: #{tpu_custom_call.1} parent=5 // pred_fallthru
        _
    $region6: #{tpu_custom_call.1} parent=1 // loop_footer
      %s21 = sadd.s32 1, %s17
    $region7: #{tpu_custom_call.1} parent=1 // loop_footer_branch
      %16 = sbr.rel target = $region3
    $region8: #{tpu_custom_call.1} parent=1 // loop_exit
      _
    %529 = vsyncpa [#allocation3], 1
    %s530 = scalar_lea.sflag [#allocation3], 1
    %531 = vsyncpa %s530, 1
    %532 = vsyncpa [#allocation4], 1
    %s533 = scalar_lea.sflag [#allocation4], 1
    %534 = vsyncpa %s533, 1

</llo_original>
